<compile_context>
chip_gen: v7x
topology: tpu7x:2x2x1
jax: 0.10.0
libtpu: 0.0.40
codegen_flags: <defaults>
</compile_context>

<pallas_src>
import functools

import jax
import jax.numpy as jnp
from jax import lax
from jax.experimental import pallas as pl
from jax.experimental.pallas import tpu as pltpu


def _round_up(x: int, m: int) -> int:
    return ((x + m - 1) // m) * m


def _device_kind() -> str:
    try:
        return jax.devices()[0].device_kind.lower()
    except Exception:
        return ""


def _stce_kernel(pred_ref, tgt_ref, out_ref, acc_ref, *,
                 tm: int, n_rows: int, tiles_per_chunk: int, needs_mask: bool):
    """Grid = (chunks, tiles_per_chunk). Each step handles a (tm, C) row tile."""
    i = pl.program_id(0)
    j = pl.program_id(1)

    @pl.when(j == 0)
    def _():
        acc_ref[...] = jnp.zeros_like(acc_ref)

    x = pred_ref[...].astype(jnp.float32)   # (tm, C)
    t = tgt_ref[...].astype(jnp.float32)    # (tm, C)

    # numerically-stable log-sum-exp per row (class axis = lanes)
    m = jnp.max(x, axis=-1, keepdims=True)                                  # (tm, 1)
    lse = jnp.log(jnp.sum(jnp.exp(x - m), axis=-1, keepdims=True)) + m      # (tm, 1)

    # -t * log_softmax(x) == t * (lse - x)
    w = t * (lse - x)                                                       # (tm, C)

    if needs_mask:
        # Ragged last tile and/or duplicate tiles from rounding n_tiles up to
        # n_chunks: rows whose global index >= n_rows hold uninitialized data.
        # Must use where (select), not multiply, so NaN/Inf garbage is discarded.
        tile_idx = i * tiles_per_chunk + j
        row = lax.broadcasted_iota(jnp.int32, (tm, 1), 0)
        w = jnp.where(tile_idx * tm + row < n_rows, w, 0.0)

    # lane-resident partial sums; only a sublane (row) reduce per step
    acc_ref[...] += jnp.sum(w, axis=0, keepdims=True)                       # (1, C)

    @pl.when(j == pl.num_programs(1) - 1)
    def _():
        out_ref[...] = acc_ref[...]   # lane-dense per-chunk partials, reduced in wrapper


def soft_target_cross_entropy(pred: jax.Array,
                              target: jax.Array,
                              reduction: str = "mean",
                              *,
                              _tm_override: int | None = None) -> jax.Array:
    """Pallas-TPU implementation of SoftTargetCrossEntropyLoss.forward."""
    if reduction not in ("mean", "sum"):
        # TODO(synk): 'none' reduction (per-row output) not wired into this scalar kernel.
        raise ValueError(f"{reduction} is not a valid value for reduction")

    assert pred.shape == target.shape
    C = pred.shape[-1]
    pred2 = pred.reshape(-1, C)
    target2 = target.reshape(-1, C)
    N = pred2.shape[0]

    kind = _device_kind()
    is_v7 = "v7" in kind
    # Physical VMEM: 64 MiB (v7x) vs 128 MiB (v5e/v6e). Budget must cover the
    # 2x double-buffered input tiles AND ~4 full-tile f32 intermediates.
    vmem_budget = (44 if is_v7 else 80) * 1024 * 1024
    vmem_limit = (48 if is_v7 else 96) * 1024 * 1024

    in_bytes = jnp.dtype(pred.dtype).itemsize + jnp.dtype(target.dtype).itemsize
    per_row_bytes = C * (2 * in_bytes + 4 * 4)      # 2x buffered inputs + ~4 f32 temps
    tm_cap = max(8, vmem_budget // per_row_bytes)
    tm_cap = min(tm_cap, 8192)                      # >= ~4 MiB/step DMA payload at small C
    # TODO(synk): for vocab-scale C where tm hits the 8-row floor, tile C with an
    # online-LSE accumulator instead of a single full-C block.

    tm_req = _tm_override if _tm_override is not None else tm_cap
    if N >= 8:
        # keep the row block a multiple of 8 sublanes and never larger than N
        tm = max(8, min((tm_req // 8) * 8, (N // 8) * 8))
    else:
        tm = N                                       # tiny input: single full-extent block

    n_real_tiles = int(pl.cdiv(N, tm))
    # Megacore chunking only where two TensorCores exist (v7x); on single-TC chips
    # a second chunk is just a serial loop with extra epilogue work.
    n_chunks = 2 if (is_v7 and n_real_tiles >= 2) else 1
    n_tiles = _round_up(n_real_tiles, n_chunks)
    tiles_per_chunk = n_tiles // n_chunks
    needs_mask = (n_real_tiles * tm != N) or (n_tiles != n_real_tiles)

    def in_map(i, j):
        # clamp duplicate tiles (from rounding) in-bounds; their rows are masked in-kernel
        return (jnp.minimum(i * tiles_per_chunk + j, n_real_tiles - 1), 0)

    kernel = functools.partial(_stce_kernel, tm=tm, n_rows=N,
                               tiles_per_chunk=tiles_per_chunk, needs_mask=needs_mask)

    partials = pl.pallas_call(
        kernel,
        out_shape=jax.ShapeDtypeStruct((n_chunks, C), jnp.float32),
        grid_spec=pltpu.PrefetchScalarGridSpec(
            num_scalar_prefetch=0,
            grid=(n_chunks, tiles_per_chunk),
            in_specs=[
                pl.BlockSpec((tm, C), in_map),
                pl.BlockSpec((tm, C), in_map),
            ],
            out_specs=pl.BlockSpec((1, C), lambda i, j: (i, 0)),
            scratch_shapes=[pltpu.VMEM((1, C), jnp.float32)],
        ),
        compiler_params=pltpu.CompilerParams(
            dimension_semantics=("parallel", "arbitrary"),
            vmem_limit_bytes=vmem_limit,
        ),
    )(pred2, target2)

    total = jnp.sum(partials)
    if reduction == "mean":
        return total / jnp.float32(N)
    return total


def _reference(pred, target, reduction="mean"):
    log_sm = jax.nn.log_softmax(pred.astype(jnp.float32), axis=-1)
    ce = jnp.sum(-target.astype(jnp.float32) * log_sm, axis=-1)
    return ce.mean() if reduction == "mean" else ce.sum()


if __name__ == "__main__":
    key = jax.random.PRNGKey(0)
    k1, k2, k3, k4 = jax.random.split(key, 4)

    # small shapes consistent with the module: (batch, seq, num_classes)
    B, S, C = 2, 8, 64
    pred = jax.random.normal(k1, (B, S, C), dtype=jnp.float32)
    target = jax.nn.softmax(jax.random.normal(k2, (B, S, C), dtype=jnp.float32), axis=-1)

    loss = jax.block_until_ready(soft_target_cross_entropy(pred, target, "mean"))
    ref = _reference(pred, target, "mean")
    assert jnp.allclose(loss, ref, rtol=1e-5, atol=1e-5), (loss, ref)

    # odd row count (exercises in-kernel ragged-row masking, no jnp.pad) + 'sum'
    pred_b = jax.random.normal(k3, (3, 5, C), dtype=jnp.float32)
    target_b = jax.nn.softmax(jax.random.normal(k4, (3, 5, C), dtype=jnp.float32), axis=-1)
    loss_b = jax.block_until_ready(soft_target_cross_entropy(pred_b, target_b, "sum"))
    ref_b = _reference(pred_b, target_b, "sum")
    assert jnp.allclose(loss_b, ref_b, rtol=1e-5, atol=1e-5), (loss_b, ref_b)

    # multi-tile (and, on v7x, multi-chunk) path with a forced small row tile:
    # exercises the 2-D grid, partial-tile mask and duplicate-tile clamping.
    pred_c = jax.random.normal(k1, (4, 83, C), dtype=jnp.float32)
    target_c = jax.nn.softmax(jax.random.normal(k2, (4, 83, C), dtype=jnp.float32), axis=-1)
    loss_c = jax.block_until_ready(
        soft_target_cross_entropy(pred_c, target_c, "mean", _tm_override=32))
    ref_c = _reference(pred_c, target_c, "mean")
    assert jnp.allclose(loss_c, ref_c, rtol=1e-4, atol=1e-5), (loss_c, ref_c)

    print("KERNEL_OK")
</pallas_src>

<mosaic_0001>
module attributes {stable_mosaic.version = 11 : i64} {
  func.func @_stce_kernel(%arg0: i32, %arg1: i32, %arg2: memref<16x64xf32, #tpu.memory_space<vmem>>, %arg3: memref<16x64xf32, #tpu.memory_space<vmem>>, %arg4: memref<1x64xf32, #tpu.memory_space<vmem>>, %arg5: memref<1x64xf32, #tpu.memory_space<vmem>>) attributes {dimension_semantics = [#tpu.dimension_semantics<parallel>, #tpu.dimension_semantics<arbitrary>], iteration_bounds = array<i64: 1, 1>, scalar_prefetch = 0 : i64, scratch_operands = 1 : i64, tpu.core_type = #tpu.core_type<tc>, window_params = [{transform_indices = @transform_0, window_bounds = array<i64: 16, 64>}, {transform_indices = @transform_1, window_bounds = array<i64: 16, 64>}, {transform_indices = @transform_2, window_bounds = array<i64: 1, 64>}]} {
    %c0_i32 = arith.constant 0 : i32
    %0 = arith.cmpi eq, %arg1, %c0_i32 : i32
    %1 = arith.extui %0 : i1 to i32
    %c0_i32_0 = arith.constant 0 : i32
    %2 = arith.cmpi ne, %1, %c0_i32_0 : i32
    scf.if %2 {
      %cst_12 = arith.constant 0.000000e+00 : f32
      %25 = vector.broadcast %cst_12 : f32 to vector<1x64xf32>
      %c0_13 = arith.constant 0 : index
      %c0_14 = arith.constant 0 : index
      %26 = vector.load %arg5[%c0_13, %c0_14] : memref<1x64xf32, #tpu.memory_space<vmem>>, vector<1x64xf32>
      tpu.vector_store %arg5[%c0_13, %c0_14], %25 {strides = array<i32>} : memref<1x64xf32, #tpu.memory_space<vmem>>, vector<1x64xf32>,
    } else {
    }
    %c0 = arith.constant 0 : index
    %c0_1 = arith.constant 0 : index
    %3 = vector.load %arg2[%c0, %c0_1] : memref<16x64xf32, #tpu.memory_space<vmem>>, vector<16x64xf32>
    %c0_2 = arith.constant 0 : index
    %c0_3 = arith.constant 0 : index
    %4 = vector.load %arg3[%c0_2, %c0_3] : memref<16x64xf32, #tpu.memory_space<vmem>>, vector<16x64xf32>
    %cst = arith.constant dense<0xFF800000> : vector<16xf32>
    %5 = vector.multi_reduction <maximumf>, %3, %cst [1] : vector<16x64xf32> to vector<16xf32>
    %6 = vector.shape_cast %5 : vector<16xf32> to vector<16x1xf32>
    %7 = vector.broadcast %6 : vector<16x1xf32> to vector<16x64xf32>
    %8 = arith.subf %3, %7 : vector<16x64xf32>
    %9 = math.exp %8 : vector<16x64xf32>
    %cst_4 = arith.constant dense<0.000000e+00> : vector<16xf32>
    %10 = vector.multi_reduction <add>, %9, %cst_4 [1] : vector<16x64xf32> to vector<16xf32>
    %11 = vector.shape_cast %10 : vector<16xf32> to vector<16x1xf32>
    %12 = math.log %11 : vector<16x1xf32>
    %13 = arith.addf %12, %6 : vector<16x1xf32>
    %14 = vector.broadcast %13 : vector<16x1xf32> to vector<16x64xf32>
    %15 = arith.subf %14, %3 : vector<16x64xf32>
    %16 = arith.mulf %4, %15 : vector<16x64xf32>
    %c0_5 = arith.constant 0 : index
    %c0_6 = arith.constant 0 : index
    %17 = vector.load %arg5[%c0_5, %c0_6] : memref<1x64xf32, #tpu.memory_space<vmem>>, vector<1x64xf32>
    %cst_7 = arith.constant dense<0.000000e+00> : vector<64xf32>
    %18 = vector.multi_reduction <add>, %16, %cst_7 [0] : vector<16x64xf32> to vector<64xf32>
    %19 = vector.shape_cast %18 : vector<64xf32> to vector<1x64xf32>
    %20 = arith.addf %17, %19 : vector<1x64xf32>
    %c0_8 = arith.constant 0 : index
    %c0_9 = arith.constant 0 : index
    %21 = vector.load %arg5[%c0_8, %c0_9] : memref<1x64xf32, #tpu.memory_space<vmem>>, vector<1x64xf32>
    tpu.vector_store %arg5[%c0_8, %c0_9], %20 {strides = array<i32>} : memref<1x64xf32, #tpu.memory_space<vmem>>, vector<1x64xf32>,
    %c0_i32_10 = arith.constant 0 : i32
    %22 = arith.cmpi eq, %arg1, %c0_i32_10 : i32
    %23 = arith.extui %22 : i1 to i32
    %c0_i32_11 = arith.constant 0 : i32
    %24 = arith.cmpi ne, %23, %c0_i32_11 : i32
    scf.if %24 {
      %c0_12 = arith.constant 0 : index
      %c0_13 = arith.constant 0 : index
      %25 = vector.load %arg5[%c0_12, %c0_13] : memref<1x64xf32, #tpu.memory_space<vmem>>, vector<1x64xf32>
      %c0_14 = arith.constant 0 : index
      %c0_15 = arith.constant 0 : index
      %26 = vector.load %arg4[%c0_14, %c0_15] : memref<1x64xf32, #tpu.memory_space<vmem>>, vector<1x64xf32>
      tpu.vector_store %arg4[%c0_14, %c0_15], %25 {strides = array<i32>} : memref<1x64xf32, #tpu.memory_space<vmem>>, vector<1x64xf32>,
    } else {
    }
    return
  }
  func.func @transform_0(%arg0: i32, %arg1: i32) -> (i32, i32) {
    %c1_i32 = arith.constant 1 : i32
    %0 = arith.muli %arg0, %c1_i32 : i32
    %1 = arith.addi %0, %arg1 : i32
    %c0_i32 = arith.constant 0 : i32
    %2 = arith.minsi %1, %c0_i32 : i32
    %c0_i32_0 = arith.constant 0 : i32
    %c0_i32_1 = arith.constant 0 : i32
    return %2, %c0_i32_0 : i32, i32
  }
  func.func @transform_1(%arg0: i32, %arg1: i32) -> (i32, i32) {
    %c1_i32 = arith.constant 1 : i32
    %0 = arith.muli %arg0, %c1_i32 : i32
    %1 = arith.addi %0, %arg1 : i32
    %c0_i32 = arith.constant 0 : i32
    %2 = arith.minsi %1, %c0_i32 : i32
    %c0_i32_0 = arith.constant 0 : i32
    %c0_i32_1 = arith.constant 0 : i32
    return %2, %c0_i32_0 : i32, i32
  }
  func.func @transform_2(%arg0: i32, %arg1: i32) -> (i32, i32) {
    %c0_i32 = arith.constant 0 : i32
    %c0_i32_0 = arith.constant 0 : i32
    return %arg0, %c0_i32 : i32, i32
  }
}

</mosaic_0001>

<llo_original>
// kernel: tpu_custom_call.1
$region0: #{tpu_custom_call.1}
  #allocation0 [shape = 'u32[]', space=smem, size = 0x4, offset = 0x4, fixed_abs, tag = 'smem constant byte address 0x4 - core index']
  #allocation1 [shape = 'u32[144,128]{1,0:T(1,128)}', space=vmem, size = 0x12000, scoped, tag = 'internal scratch']
  #allocation2 [shape = 'f32[1,64]{1,0:T(1,128)}', space=vmem, size = 0x200, scoped, tag = 'scratch operand']
  %s0 = inlined_call_operand.hbm [shape: f32[16,64], index: 0, kind: input, shape index: {}]
  %s1 = inlined_call_operand.hbm [shape: f32[16,64], index: 1, kind: input, shape index: {}]
  %s2 = inlined_call_operand.hbm [shape: f32[1,64], index: 2, kind: output, shape index: {}]
  %s3 = sld [smem:[#allocation0]]
  $region34: #{tpu_custom_call.1} parent=0
    _
  %s5 = ssub.s32 1, %s3
  %s6 = scalar_select 0, %s5, %s3
  $region1: #{tpu_custom_call.1} parent=0
    #allocation3 [shape = 'u8[8192]{0}', space=vmem, size = 0x2000, scoped, tag = 'input window, operand 0, single buffered']
    #allocation4 [shape = 's32[1]{0}', space=sflag, size = 0x4, scoped, tag = 'scoped memory for tpu_custom_call.1']
    #allocation5 [shape = 's32[1]{0}', space=sflag, size = 0x4, scoped, tag = 'scoped memory for tpu_custom_call.1']
    #allocation6 [shape = 'u8[8192]{0}', space=vmem, size = 0x2000, scoped, tag = 'input window, operand 1, single buffered']
    #allocation7 [shape = 's32[1]{0}', space=sflag, size = 0x4, scoped, tag = 'scoped memory for tpu_custom_call.1']
    #allocation8 [shape = 'u8[512]{0}', space=vmem, size = 0x400, scoped, tag = 'output window, operand 0, single buffered']
    %7 = vsyncpa [#allocation4], 0
    %8 = vsyncpa [#allocation7], 0
    %9 = vsyncpa [#allocation5], 0
    // Predicated region
    $region2: #{tpu_custom_call.1} parent=1 // pred_check
      _
    $region3: #{tpu_custom_call.1} parent=1 // pred_check_branch
      %11 = sbr.rel (0) target = $region5
    $region4: #{tpu_custom_call.1} parent=1 // pred_region
      %s12 = sadd.s32 0, 0
      %p13 = scmp.lt.s32.totalorder %s12, 0
      %s14 = scalar_select %p13, %s12, 0
      %s15 = smul.u32 2, %s14
      %s17 = ssub.s32 256, 256
      %18 = vsyncadd [#allocation4], %s17
      %s19 = smul.addr %s15, 128
      %s20 = scalar_lea.hbm %s0, %s19
      %s21 = sshll.u32 [#allocation3], 4
      %s22 = int_to_ptr.vmem [resolvable:$true] %s21
      %27 = dma.hbm_to_vmem [thread:$0]  %s20, 256, %s22, [#allocation4], 128, 128, 8
    $region5: #{tpu_custom_call.1} parent=1 // pred_fallthru
      _
    // Predicated region
    $region6: #{tpu_custom_call.1} parent=1 // pred_check
      _
    $region7: #{tpu_custom_call.1} parent=1 // pred_check_branch
      %29 = sbr.rel (0) target = $region9
    $region8: #{tpu_custom_call.1} parent=1 // pred_region
      %s30 = sadd.s32 0, 0
      %p31 = scmp.lt.s32.totalorder %s30, 0
      %s32 = scalar_select %p31, %s30, 0
      %s33 = smul.u32 2, %s32
      %s35 = ssub.s32 256, 256
      %36 = vsyncadd [#allocation7], %s35
      %s37 = smul.addr %s33, 128
      %s38 = scalar_lea.hbm %s1, %s37
      %s39 = sshll.u32 [#allocation6], 4
      %s40 = int_to_ptr.vmem [resolvable:$true] %s39
      %45 = dma.hbm_to_vmem [thread:$0]  %s38, 256, %s40, [#allocation7], 128, 128, 8
    $region9: #{tpu_custom_call.1} parent=1 // pred_fallthru
      _
    // Predicated region
    $region10: #{tpu_custom_call.1} parent=1 // pred_check
      _
    $region11: #{tpu_custom_call.1} parent=1 // pred_check_branch
      %47 = sbr.rel (0) target = $region13
    $region12: #{tpu_custom_call.1} parent=1 // pred_region
      %48 = dma.done [#allocation4], 256
    $region13: #{tpu_custom_call.1} parent=1 // pred_fallthru
      _
    // Predicated region
    $region14: #{tpu_custom_call.1} parent=1 // pred_check
      _
    $region15: #{tpu_custom_call.1} parent=1 // pred_check_branch
      %50 = sbr.rel (0) target = $region17
    $region16: #{tpu_custom_call.1} parent=1 // pred_region
      %51 = dma.done [#allocation7], 256
    $region17: #{tpu_custom_call.1} parent=1 // pred_fallthru
      _
    %s52 = sadd.s32 0, 0
    %p53 = scmp.lt.s32.totalorder %s52, 0
    %s54 = scalar_select %p53, %s52, 0
    %s55 = smul.u32 2, %s54
    %s56 = sadd.s32 0, 0
    %p57 = scmp.lt.s32.totalorder %s56, 0
    %s58 = scalar_select %p57, %s56, 0
    %s59 = smul.u32 2, %s58
    %p60 = scmp.eq.s32.totalorder 0, 0
    // Predicated region
    $region18: #{tpu_custom_call.1} parent=1 // pred_check
      %p61 = pneg %p60
    $region19: #{tpu_custom_call.1} parent=1 // pred_check_branch
      %63 = sbr.rel (%p61) target = $region21
    $region20: #{tpu_custom_call.1} parent=1 // pred_region
      %vm64 = vcmask 516096
      %65 = vst.msk [vmem:[#allocation2] sm:$0x1] %vm64, 0.0
    $region21: #{tpu_custom_call.1} parent=1 // pred_fallthru
      _
    %v66 = vld [vmem:[#allocation3] sm:$0xff]
    %v67 = vld [vmem:[#allocation3 + $0x8] sm:$0xff]
    %v68 = vld [vmem:[#allocation6] sm:$0xff]
    %v69 = vld [vmem:[#allocation6 + $0x8] sm:$0xff]
    %vm70 = vcmask 523264
    %v71 = vsel %vm70, %v66, -inf
    %72 = vmax.xlane.f32.xlu0 %v71
    %v73 = vpop.xlane.xlu0 %72
    %v74 = vsel %vm70, %v67, -inf
    %75 = vmax.xlane.f32.xlu0 %v74
    %v76 = vpop.xlane.xlu0 %75
    %v77 = vsub.f32 %v66, %v73
    %v78 = vsub.f32 %v67, %v76
    %v79 = vmul.f32 %v77, 1.442695
    %v80 = vpow.pop %v79
    %v81 = vmul.f32 %v78, 1.442695
    %v82 = vpow.pop %v81
    %v83 = vsel %vm70, %v80, 0.0
    %84 = vadd.xlane.f32.xlu0 %v83
    %v85 = vpop.xlane.xlu0 %84
    %v86 = vsel %vm70, %v82, 0.0
    %87 = vadd.xlane.f32.xlu0 %v86
    %v88 = vpop.xlane.xlu0 %87
    %v89 = vlog2.pop %v85
    %v90 = vmul.f32 %v89, 0.6931472
    %v91 = vlog2.pop %v88
    %v92 = vmul.f32 %v91, 0.6931472
    %v93 = vadd.f32 %v90, %v73
    %v94 = vadd.f32 %v92, %v76
    %v95 = vsub.f32 %v93, %v66
    %v96 = vsub.f32 %v94, %v67
    %v97 = vmul.f32 %v68, %v95
    %v98 = vmul.f32 %v69, %v96
    %v99 = vld [vmem:[#allocation2] sm:$0x1]
    %v100 = vsel %vm70, %v97, 0.0
    %v101 = vsel %vm70, %v98, 0.0
    %v102 = vadd.f32 %v100, %v101
    %v103 = vrot.slane %v102, 4
    %v104 = vadd.f32 %v102, %v103
    %v105 = vrot.slane %v104, 2
    %v106 = vadd.f32 %v104, %v105
    %v107 = vrot.slane %v106, 1
    %v108 = vadd.f32 %v106, %v107
    %v109 = vadd.f32 %v99, %v108
    %vm110 = vcmask 516096
    %111 = vst.msk [vmem:[#allocation2] sm:$0x1] %vm110, %v109
    // Predicated region
    $region22: #{tpu_custom_call.1} parent=1 // pred_check
      %p112 = pneg %p60
    $region23: #{tpu_custom_call.1} parent=1 // pred_check_branch
      %114 = sbr.rel (%p112) target = $region25
    $region24: #{tpu_custom_call.1} parent=1 // pred_region
      %v115 = vld [vmem:[#allocation2] sm:$0x1]
      %116 = vst.msk [vmem:[#allocation8] sm:$0x1] %vm110, %v115
    $region25: #{tpu_custom_call.1} parent=1 // pred_fallthru
      _
    // Predicated region
    $region26: #{tpu_custom_call.1} parent=1 // pred_check
      _
    $region27: #{tpu_custom_call.1} parent=1 // pred_check_branch
      %118 = sbr.rel (0) target = $region29
    $region28: #{tpu_custom_call.1} parent=1 // pred_region
      %s120 = ssub.s32 16, 16
      %121 = vsyncadd [#allocation5], %s120
      %s123 = sshll.u32 [#allocation8], 4
      %s124 = int_to_ptr.vmem [resolvable:$true] %s123
      %126 = dma.vmem_to_hbm [thread:$0]  %s124, 16, %s2, [#allocation5]
    $region29: #{tpu_custom_call.1} parent=1 // pred_fallthru
      _
    // Predicated region
    $region30: #{tpu_custom_call.1} parent=1 // pred_check
      _
    $region31: #{tpu_custom_call.1} parent=1 // pred_check_branch
      %128 = sbr.rel (0) target = $region33
    $region32: #{tpu_custom_call.1} parent=1 // pred_region
      %129 = dma.done [#allocation5], 16
    $region33: #{tpu_custom_call.1} parent=1 // pred_fallthru
      _
    %130 = vsyncpa [#allocation4], 1
    %131 = vsyncpa [#allocation7], 1
    %132 = vsyncpa [#allocation5], 1

</llo_original>
